<compile_context>
chip_gen: v5e
topology: v5e:2x2
jax: 0.10.0
libtpu: 0.0.40
codegen_flags: <defaults>
</compile_context>

<pallas_src>
import functools

import jax
import jax.numpy as jnp
from jax.experimental import pallas as pl
from jax.experimental.pallas import tpu as pltpu


LANE = 128      # lane-pad target for every feature dim (v5e/v6e/v7x vreg lane count)
SUBLANE = 8


def _round_up(x, m):
    return -(-x // m) * m


# ----------------------------------------------------------------------------
# Pallas kernel: fused embedding-pool + 3-layer MLP for one batch tile.
#   tok_ref : (TB, S)        int32   token ids (batch-pad rows hold token 0)
#   emb_ref : (Vp, 128)      bf16    zero-padded token-embedding table
#   w_ref   : (3, 128, 128)  bf16    [w1/S, w2, w3], zero padded
#   b_ref   : (8, 128)       f32     rows 0..2 = [b1 + pos_mean@w1, b2, b3]
#   o_ref   : (TB, 128)      f32     padded logits
# ----------------------------------------------------------------------------
def _mlp_control_kernel(tok_ref, emb_ref, w_ref, b_ref, o_ref):
    toks = tok_ref[...]                          # (TB, S) int32
    tb, seq_len = toks.shape
    vocab = emb_ref.shape[0]                     # multiple of 128 -> lane-dense

    # One-hot token counts (TB, Vp): counts[b, v] = #{s : toks[b, s] == v}.
    # Static unroll over S; each step is one full-vreg VPU compare + add.
    v_iota = jax.lax.broadcasted_iota(jnp.int32, (tb, vocab), 1)
    counts = jnp.zeros((tb, vocab), jnp.float32)
    for s in range(seq_len):
        counts = counts + (toks[:, s:s + 1] == v_iota).astype(jnp.float32)

    # Pooled SUM of token embeddings: counts @ tok_emb  (MXU, bf16 x bf16 -> f32).
    # Counts <= S, exactly representable in bf16.  The 1/S scale and the
    # positional-embedding mean are already folded into w1 / b1.
    pooled = jnp.dot(counts.astype(jnp.bfloat16), emb_ref[...],
                     preferred_element_type=jnp.float32)        # (TB, 128)

    # Linear 1 + ReLU   (w1 already carries the 1/S factor; b1 the pos term)
    h = jnp.dot(pooled.astype(jnp.bfloat16), w_ref[0],
                preferred_element_type=jnp.float32) + b_ref[0:1, :]
    h = jnp.maximum(h, 0.0)

    # Linear 2 + ReLU
    h = jnp.dot(h.astype(jnp.bfloat16), w_ref[1],
                preferred_element_type=jnp.float32) + b_ref[1:2, :]
    h = jnp.maximum(h, 0.0)

    # Linear 3 (logits)
    out = jnp.dot(h.astype(jnp.bfloat16), w_ref[2],
                  preferred_element_type=jnp.float32) + b_ref[2:3, :]

    o_ref[...] = out.astype(o_ref.dtype)


def mlp_control_pallas(tokens, prep):
    """tokens: (B, S) int32; prep: prepared/padded params -> (B_pad, 128) f32."""
    B, S = tokens.shape
    Vp, DP = prep["tok_emb"].shape

    # Pad batch to a sublane-full, tileable size; pad rows use token id 0 and
    # are discarded by the wrapper slice.
    B_pad = max(SUBLANE, _round_up(B, SUBLANE))
    TB = min(B_pad, 256)
    B_pad = _round_up(B_pad, TB)
    if B_pad != B:
        tokens = jnp.pad(tokens, ((0, B_pad - B), (0, 0)))

    grid = (B_pad // TB,)

    return pl.pallas_call(
        _mlp_control_kernel,
        out_shape=jax.ShapeDtypeStruct((B_pad, DP), jnp.float32),
        grid=grid,
        in_specs=[
            pl.BlockSpec((TB, S), lambda i: (i, 0)),        # tokens: tiled over batch
            pl.BlockSpec((Vp, DP), lambda i: (0, 0)),       # tok_emb: VMEM-resident
            pl.BlockSpec((3, DP, DP), lambda i: (0, 0, 0)), # weight slab: resident
            pl.BlockSpec((SUBLANE, DP), lambda i: (0, 0)),  # bias slab: resident
        ],
        out_specs=pl.BlockSpec((TB, DP), lambda i: (i, 0)),
        compiler_params=pltpu.CompilerParams(
            dimension_semantics=("parallel",)),
    )(tokens, prep["tok_emb"], prep["w_slab"], prep["b_slab"])


# ----------------------------------------------------------------------------
# One-time parameter preparation: zero-pad to 128, fold 1/S into w1 and the
# positional-embedding mean into b1, cast MXU operands to bf16, build slabs.
# ----------------------------------------------------------------------------
def prepare_params(raw, seq_len):
    V, D = raw["tok_emb"].shape
    H1 = raw["w1"].shape[1]
    H2 = raw["w2"].shape[1]
    C = raw["w3"].shape[1]
    assert max(D, H1, H2, C) <= LANE, "feature dims must fit a single 128 tile"

    def pad2(a, rows, cols):
        r, c = a.shape
        return jnp.pad(a, ((0, rows - r), (0, cols - c)))

    # Vocab padded to a multiple of 128 so the in-kernel one-hot compares and
    # the counts MXU operand are fully lane-dense.
    Vp = _round_up(V, LANE)

    # Fold mean(pos_emb[:S]) @ w1 into b1, and 1/S into w1 (exact linear algebra).
    pos_mean = jnp.mean(raw["pos_emb"][:seq_len], axis=0)            # (D,)
    b1_fused = raw["b1"] + pos_mean[None, :] @ raw["w1"]             # (1, H1)
    w1_fused = raw["w1"] / jnp.float32(seq_len)                      # (D, H1)

    w_slab = jnp.stack([
        pad2(w1_fused, LANE, LANE),
        pad2(raw["w2"], LANE, LANE),
        pad2(raw["w3"], LANE, LANE),
    ], axis=0).astype(jnp.bfloat16)                                  # (3,128,128)

    b_slab = jnp.zeros((SUBLANE, LANE), jnp.float32)
    b_slab = b_slab.at[0, :H1].set(b1_fused[0])
    b_slab = b_slab.at[1, :H2].set(raw["b2"][0])
    b_slab = b_slab.at[2, :C].set(raw["b3"][0])

    tok_emb_p = pad2(raw["tok_emb"], Vp, LANE).astype(jnp.bfloat16)  # (Vp,128)

    return {"tok_emb": tok_emb_p, "w_slab": w_slab, "b_slab": b_slab}


def init_params(key, *, vocab_size, max_seq_len, d_embedding, h1, h2,
                num_classes):
    keys = jax.random.split(key, 8)

    def uni(k, shape, fan_in):
        bound = 1.0 / jnp.sqrt(jnp.float32(fan_in))
        return jax.random.uniform(k, shape, jnp.float32, -bound, bound)

    return {
        "tok_emb": jax.random.normal(keys[0], (vocab_size, d_embedding),
                                     jnp.float32) * 0.02,
        "pos_emb": jax.random.normal(keys[1], (max_seq_len, d_embedding),
                                     jnp.float32) * 0.02,
        "w1": uni(keys[2], (d_embedding, h1), d_embedding),
        "b1": uni(keys[3], (1, h1), d_embedding),
        "w2": uni(keys[4], (h1, h2), h1),
        "b2": uni(keys[5], (1, h2), h1),
        "w3": uni(keys[6], (h2, num_classes), h2),
        "b3": uni(keys[7], (1, num_classes), h2),
    }


@functools.partial(jax.jit, static_argnums=(2,))
def mlp_control_forward(tokens, prep, num_classes):
    B = tokens.shape[0]
    logits_padded = mlp_control_pallas(tokens, prep)
    return logits_padded[:B, :num_classes]


# ----------------------------------------------------------------------------
# References.
# ----------------------------------------------------------------------------
def mlp_control_reference_f32(tokens, raw):
    """Module semantics: f32 gather + pos emb + mean + 3 linears (dropout=eval)."""
    S = tokens.shape[1]
    x = jnp.take(raw["tok_emb"], tokens, axis=0) + raw["pos_emb"][None, :S, :]
    pooled = jnp.mean(x, axis=1)
    h = jnp.maximum(pooled @ raw["w1"] + raw["b1"], 0.0)
    h = jnp.maximum(h @ raw["w2"] + raw["b2"], 0.0)
    return h @ raw["w3"] + raw["b3"]


def mlp_control_reference_matched(tokens, prep, num_classes):
    """Mirrors the kernel math (bf16 MXU operands, f32 accumulate) in plain JAX."""
    Vp = prep["tok_emb"].shape[0]
    counts = jax.nn.one_hot(tokens, Vp, dtype=jnp.float32).sum(axis=1)
    pooled = jnp.dot(counts.astype(jnp.bfloat16), prep["tok_emb"],
                     preferred_element_type=jnp.float32)
    h = jnp.maximum(jnp.dot(pooled.astype(jnp.bfloat16), prep["w_slab"][0],
                            preferred_element_type=jnp.float32)
                    + prep["b_slab"][0:1, :], 0.0)
    h = jnp.maximum(jnp.dot(h.astype(jnp.bfloat16), prep["w_slab"][1],
                            preferred_element_type=jnp.float32)
                    + prep["b_slab"][1:2, :], 0.0)
    out = jnp.dot(h.astype(jnp.bfloat16), prep["w_slab"][2],
                  preferred_element_type=jnp.float32) + prep["b_slab"][2:3, :]
    return out[:, :num_classes]


if __name__ == "__main__":
    B, S = 2, 8                 # (batch_size, seq_len)
    VOCAB = 32
    MAX_SEQ_LEN = 16
    D_EMBED = 60                # d_embedding=60 as in EmbeddingBlock(...)
    H1, H2 = 32, 32             # mlp l1/l2 out_features
    NUM_CLASSES = 10            # mlp l3 out_features

    key = jax.random.PRNGKey(0)
    pkey, tkey = jax.random.split(key)

    raw = init_params(pkey, vocab_size=VOCAB, max_seq_len=MAX_SEQ_LEN,
                      d_embedding=D_EMBED, h1=H1, h2=H2,
                      num_classes=NUM_CLASSES)
    prep = prepare_params(raw, seq_len=S)

    tokens = jax.random.randint(tkey, (B, S), 0, VOCAB, dtype=jnp.int32)

    out = mlp_control_forward(tokens, prep, NUM_CLASSES)
    out = jax.block_until_ready(out)
    assert out.shape == (B, NUM_CLASSES), out.shape

    # Exact check against a reference that mirrors the kernel's bf16-MXU math.
    ref_matched = mlp_control_reference_matched(tokens, prep, NUM_CLASSES)
    assert jnp.allclose(out, ref_matched, atol=2e-3, rtol=2e-3), (
        "Pallas kernel mismatch vs bf16-matched reference")

    # Semantics check against the pure-f32 module reference (bf16 MXU operands
    # introduce ~0.1-1% relative error, well within this tolerance).
    ref_f32 = mlp_control_reference_f32(tokens, raw)
    assert jnp.allclose(out, ref_f32, atol=2e-2, rtol=2e-2), (
        "Pallas kernel deviates from module-semantics f32 reference")

    print("KERNEL_OK")
</pallas_src>

<mosaic_0001>
module attributes {stable_mosaic.version = 11 : i64} {
  func.func @_mlp_control_kernel(%arg0: i32, %arg1: memref<8x8xi32, #tpu.memory_space<vmem>>, %arg2: memref<128x128xbf16, #tpu.memory_space<vmem>>, %arg3: memref<3x128x128xbf16, #tpu.memory_space<vmem>>, %arg4: memref<8x128xf32, #tpu.memory_space<vmem>>, %arg5: memref<8x128xf32, #tpu.memory_space<vmem>>) attributes {dimension_semantics = [#tpu.dimension_semantics<parallel>], iteration_bounds = array<i64: 1>, scalar_prefetch = 0 : i64, scratch_operands = 0 : i64, tpu.core_type = #tpu.core_type<tc>, window_params = [{transform_indices = @transform_0, window_bounds = array<i64: 8, 8>}, {pipeline_mode = #tpu.pipeline_mode<synchronous>, transform_indices = @transform_1, window_bounds = array<i64: 128, 128>}, {pipeline_mode = #tpu.pipeline_mode<synchronous>, transform_indices = @transform_2, window_bounds = array<i64: 3, 128, 128>}, {pipeline_mode = #tpu.pipeline_mode<synchronous>, transform_indices = @transform_3, window_bounds = array<i64: 8, 128>}, {transform_indices = @transform_4, window_bounds = array<i64: 8, 128>}]} {
    %c0 = arith.constant 0 : index
    %c0_0 = arith.constant 0 : index
    %0 = vector.load %arg1[%c0, %c0_0] : memref<8x8xi32, #tpu.memory_space<vmem>>, vector<8x8xi32>
    %1 = tpu.iota {dimensions = array<i32: 1>} : vector<8x128xi32>
    %cst = arith.constant 0.000000e+00 : f32
    %2 = vector.broadcast %cst : f32 to vector<8x128xf32>
    %3 = vector.extract_strided_slice %0 {offsets = [0, 0], sizes = [8, 1], strides = [1, 1]} : vector<8x8xi32> to vector<8x1xi32>
    %4 = vector.broadcast %3 : vector<8x1xi32> to vector<8x128xi32>
    %5 = arith.cmpi eq, %4, %1 : vector<8x128xi32>
    %6 = arith.extui %5 : vector<8x128xi1> to vector<8x128xi32>
    %7 = arith.sitofp %6 : vector<8x128xi32> to vector<8x128xf32>
    %8 = arith.addf %2, %7 : vector<8x128xf32>
    %9 = vector.extract_strided_slice %0 {offsets = [0, 1], sizes = [8, 1], strides = [1, 1]} : vector<8x8xi32> to vector<8x1xi32>
    %10 = vector.broadcast %9 : vector<8x1xi32> to vector<8x128xi32>
    %11 = arith.cmpi eq, %10, %1 : vector<8x128xi32>
    %12 = arith.extui %11 : vector<8x128xi1> to vector<8x128xi32>
    %13 = arith.sitofp %12 : vector<8x128xi32> to vector<8x128xf32>
    %14 = arith.addf %8, %13 : vector<8x128xf32>
    %15 = vector.extract_strided_slice %0 {offsets = [0, 2], sizes = [8, 1], strides = [1, 1]} : vector<8x8xi32> to vector<8x1xi32>
    %16 = vector.broadcast %15 : vector<8x1xi32> to vector<8x128xi32>
    %17 = arith.cmpi eq, %16, %1 : vector<8x128xi32>
    %18 = arith.extui %17 : vector<8x128xi1> to vector<8x128xi32>
    %19 = arith.sitofp %18 : vector<8x128xi32> to vector<8x128xf32>
    %20 = arith.addf %14, %19 : vector<8x128xf32>
    %21 = vector.extract_strided_slice %0 {offsets = [0, 3], sizes = [8, 1], strides = [1, 1]} : vector<8x8xi32> to vector<8x1xi32>
    %22 = vector.broadcast %21 : vector<8x1xi32> to vector<8x128xi32>
    %23 = arith.cmpi eq, %22, %1 : vector<8x128xi32>
    %24 = arith.extui %23 : vector<8x128xi1> to vector<8x128xi32>
    %25 = arith.sitofp %24 : vector<8x128xi32> to vector<8x128xf32>
    %26 = arith.addf %20, %25 : vector<8x128xf32>
    %27 = vector.extract_strided_slice %0 {offsets = [0, 4], sizes = [8, 1], strides = [1, 1]} : vector<8x8xi32> to vector<8x1xi32>
    %28 = vector.broadcast %27 : vector<8x1xi32> to vector<8x128xi32>
    %29 = arith.cmpi eq, %28, %1 : vector<8x128xi32>
    %30 = arith.extui %29 : vector<8x128xi1> to vector<8x128xi32>
    %31 = arith.sitofp %30 : vector<8x128xi32> to vector<8x128xf32>
    %32 = arith.addf %26, %31 : vector<8x128xf32>
    %33 = vector.extract_strided_slice %0 {offsets = [0, 5], sizes = [8, 1], strides = [1, 1]} : vector<8x8xi32> to vector<8x1xi32>
    %34 = vector.broadcast %33 : vector<8x1xi32> to vector<8x128xi32>
    %35 = arith.cmpi eq, %34, %1 : vector<8x128xi32>
    %36 = arith.extui %35 : vector<8x128xi1> to vector<8x128xi32>
    %37 = arith.sitofp %36 : vector<8x128xi32> to vector<8x128xf32>
    %38 = arith.addf %32, %37 : vector<8x128xf32>
    %39 = vector.extract_strided_slice %0 {offsets = [0, 6], sizes = [8, 1], strides = [1, 1]} : vector<8x8xi32> to vector<8x1xi32>
    %40 = vector.broadcast %39 : vector<8x1xi32> to vector<8x128xi32>
    %41 = arith.cmpi eq, %40, %1 : vector<8x128xi32>
    %42 = arith.extui %41 : vector<8x128xi1> to vector<8x128xi32>
    %43 = arith.sitofp %42 : vector<8x128xi32> to vector<8x128xf32>
    %44 = arith.addf %38, %43 : vector<8x128xf32>
    %45 = vector.extract_strided_slice %0 {offsets = [0, 7], sizes = [8, 1], strides = [1, 1]} : vector<8x8xi32> to vector<8x1xi32>
    %46 = vector.broadcast %45 : vector<8x1xi32> to vector<8x128xi32>
    %47 = arith.cmpi eq, %46, %1 : vector<8x128xi32>
    %48 = arith.extui %47 : vector<8x128xi1> to vector<8x128xi32>
    %49 = arith.sitofp %48 : vector<8x128xi32> to vector<8x128xf32>
    %50 = arith.addf %44, %49 : vector<8x128xf32>
    %51 = arith.truncf %50 : vector<8x128xf32> to vector<8x128xbf16>
    %c0_1 = arith.constant 0 : index
    %c0_2 = arith.constant 0 : index
    %52 = vector.load %arg2[%c0_1, %c0_2] : memref<128x128xbf16, #tpu.memory_space<vmem>>, vector<128x128xbf16>
    %cst_3 = arith.constant dense<0.000000e+00> : vector<8x128xf32>
    %53 = tpu.matmul %51, %52, %cst_3 {dimension_numbers = #tpu.dot_dimension_numbers<[1], [0], [0], [1], [0, 0, 1, 1], [], []>} : vector<8x128xbf16>, vector<128x128xbf16>, vector<8x128xf32> -> vector<8x128xf32>
    %54 = arith.truncf %53 : vector<8x128xf32> to vector<8x128xbf16>
    %c0_4 = arith.constant 0 : index
    %c0_5 = arith.constant 0 : index
    %c0_6 = arith.constant 0 : index
    %55 = vector.load %arg3[%c0_4, %c0_5, %c0_6] : memref<3x128x128xbf16, #tpu.memory_space<vmem>>, vector<1x128x128xbf16>
    %56 = vector.shape_cast %55 : vector<1x128x128xbf16> to vector<128x128xbf16>
    %cst_7 = arith.constant dense<0.000000e+00> : vector<8x128xf32>
    %57 = tpu.matmul %54, %56, %cst_7 {dimension_numbers = #tpu.dot_dimension_numbers<[1], [0], [0], [1], [0, 0, 1, 1], [], []>} : vector<8x128xbf16>, vector<128x128xbf16>, vector<8x128xf32> -> vector<8x128xf32>
    %c0_8 = arith.constant 0 : index
    %c0_9 = arith.constant 0 : index
    %58 = vector.load %arg4[%c0_8, %c0_9] : memref<8x128xf32, #tpu.memory_space<vmem>>, vector<1x128xf32>
    %59 = vector.broadcast %58 : vector<1x128xf32> to vector<8x128xf32>
    %60 = arith.addf %57, %59 : vector<8x128xf32>
    %cst_10 = arith.constant 0.000000e+00 : f32
    %61 = vector.broadcast %cst_10 : f32 to vector<8x128xf32>
    %62 = arith.maximumf %60, %61 : vector<8x128xf32>
    %63 = arith.truncf %62 : vector<8x128xf32> to vector<8x128xbf16>
    %c1 = arith.constant 1 : index
    %c0_11 = arith.constant 0 : index
    %c0_12 = arith.constant 0 : index
    %64 = vector.load %arg3[%c1, %c0_11, %c0_12] : memref<3x128x128xbf16, #tpu.memory_space<vmem>>, vector<1x128x128xbf16>
    %65 = vector.shape_cast %64 : vector<1x128x128xbf16> to vector<128x128xbf16>
    %cst_13 = arith.constant dense<0.000000e+00> : vector<8x128xf32>
    %66 = tpu.matmul %63, %65, %cst_13 {dimension_numbers = #tpu.dot_dimension_numbers<[1], [0], [0], [1], [0, 0, 1, 1], [], []>} : vector<8x128xbf16>, vector<128x128xbf16>, vector<8x128xf32> -> vector<8x128xf32>
    %c1_14 = arith.constant 1 : index
    %c0_15 = arith.constant 0 : index
    %67 = vector.load %arg4[%c1_14, %c0_15] : memref<8x128xf32, #tpu.memory_space<vmem>>, vector<1x128xf32>
    %68 = vector.broadcast %67 : vector<1x128xf32> to vector<8x128xf32>
    %69 = arith.addf %66, %68 : vector<8x128xf32>
    %cst_16 = arith.constant 0.000000e+00 : f32
    %70 = vector.broadcast %cst_16 : f32 to vector<8x128xf32>
    %71 = arith.maximumf %69, %70 : vector<8x128xf32>
    %72 = arith.truncf %71 : vector<8x128xf32> to vector<8x128xbf16>
    %c2 = arith.constant 2 : index
    %c0_17 = arith.constant 0 : index
    %c0_18 = arith.constant 0 : index
    %73 = vector.load %arg3[%c2, %c0_17, %c0_18] : memref<3x128x128xbf16, #tpu.memory_space<vmem>>, vector<1x128x128xbf16>
    %74 = vector.shape_cast %73 : vector<1x128x128xbf16> to vector<128x128xbf16>
    %cst_19 = arith.constant dense<0.000000e+00> : vector<8x128xf32>
    %75 = tpu.matmul %72, %74, %cst_19 {dimension_numbers = #tpu.dot_dimension_numbers<[1], [0], [0], [1], [0, 0, 1, 1], [], []>} : vector<8x128xbf16>, vector<128x128xbf16>, vector<8x128xf32> -> vector<8x128xf32>
    %c2_20 = arith.constant 2 : index
    %c0_21 = arith.constant 0 : index
    %76 = vector.load %arg4[%c2_20, %c0_21] : memref<8x128xf32, #tpu.memory_space<vmem>>, vector<1x128xf32>
    %77 = vector.broadcast %76 : vector<1x128xf32> to vector<8x128xf32>
    %78 = arith.addf %75, %77 : vector<8x128xf32>
    %c0_22 = arith.constant 0 : index
    %c0_23 = arith.constant 0 : index
    %79 = vector.load %arg5[%c0_22, %c0_23] : memref<8x128xf32, #tpu.memory_space<vmem>>, vector<8x128xf32>
    tpu.vector_store %arg5[%c0_22, %c0_23], %78 {strides = array<i32>} : memref<8x128xf32, #tpu.memory_space<vmem>>, vector<8x128xf32>,
    return
  }
  func.func @transform_0(%arg0: i32) -> (i32, i32) {
    %c0_i32 = arith.constant 0 : i32
    %c0_i32_0 = arith.constant 0 : i32
    return %arg0, %c0_i32 : i32, i32
  }
  func.func @transform_1(%arg0: i32) -> (i32, i32) {
    %c0_i32 = arith.constant 0 : i32
    %c0_i32_0 = arith.constant 0 : i32
    %c0_i32_1 = arith.constant 0 : i32
    return %c0_i32, %c0_i32_0 : i32, i32
  }
  func.func @transform_2(%arg0: i32) -> (i32, i32, i32) {
    %c0_i32 = arith.constant 0 : i32
    %c0_i32_0 = arith.constant 0 : i32
    %c0_i32_1 = arith.constant 0 : i32
    %c0_i32_2 = arith.constant 0 : i32
    return %c0_i32, %c0_i32_0, %c0_i32_1 : i32, i32, i32
  }
  func.func @transform_3(%arg0: i32) -> (i32, i32) {
    %c0_i32 = arith.constant 0 : i32
    %c0_i32_0 = arith.constant 0 : i32
    %c0_i32_1 = arith.constant 0 : i32
    return %c0_i32, %c0_i32_0 : i32, i32
  }
  func.func @transform_4(%arg0: i32) -> (i32, i32) {
    %c0_i32 = arith.constant 0 : i32
    %c0_i32_0 = arith.constant 0 : i32
    return %arg0, %c0_i32 : i32, i32
  }
}

</mosaic_0001>

<llo_original>
// kernel: mlp_control_forward.1
$region0: #{mlp_control_forward.1}
  #allocation0 [shape = 'u32[]', space=smem, size = 0x4, offset = 0x4, fixed_abs, tag = 'smem constant byte address 0x4 - core index']
  #allocation1 [shape = 'u32[72,128]{1,0:T(1,128)}', space=vmem, size = 0x9000, scoped, tag = 'internal scratch']
  %s0 = inlined_call_operand.vmem [shape: s32[8,8], index: 0, kind: input, shape index: {}]
  %s1 = inlined_call_operand.hbm [shape: bf16[128,128], index: 1, kind: input, shape index: {}]
  %s2 = inlined_call_operand.hbm [shape: bf16[3,128,128], index: 2, kind: input, shape index: {}]
  %s3 = inlined_call_operand.vmem [shape: f32[8,128], index: 3, kind: input, shape index: {}]
  %s4 = inlined_call_operand.vmem [shape: f32[8,128], index: 4, kind: output, shape index: {}]
  %s5 = sld [smem:[#allocation0]]
  $region34: #{mlp_control_forward.1} parent=0
    _
  %s7 = ssub.s32 1, %s5
  %s8 = scalar_select 0, %s7, %s5
  $region1: #{mlp_control_forward.1} parent=0
    #allocation2 [shape = 'u8[32768]{0}', space=vmem, size = 0x8000, scoped, tag = 'input window, operand 1, single buffered']
    #allocation3 [shape = 's32[1]{0}', space=sflag, size = 0x4, scoped, tag = 'scoped memory for mlp_control_forward.1']
    #allocation4 [shape = 'u8[98304]{0}', space=vmem, size = 0x18000, scoped, tag = 'input window, operand 2, single buffered']
    #allocation5 [shape = 's32[1]{0}', space=sflag, size = 0x4, scoped, tag = 'scoped memory for mlp_control_forward.1']
    %9 = vsyncpa [#allocation3], 0
    %10 = vsyncpa [#allocation5], 0
    // Predicated region
    $region2: #{mlp_control_forward.1} parent=1 // pred_check
      _
    $region3: #{mlp_control_forward.1} parent=1 // pred_check_branch
      %12 = sbr.rel (0) target = $region5
    $region4: #{mlp_control_forward.1} parent=1 // pred_region
      _
    $region5: #{mlp_control_forward.1} parent=1 // pred_fallthru
      _
    // Predicated region
    $region6: #{mlp_control_forward.1} parent=1 // pred_check
      _
    $region7: #{mlp_control_forward.1} parent=1 // pred_check_branch
      %14 = sbr.rel (0) target = $region9
    $region8: #{mlp_control_forward.1} parent=1 // pred_region
      %16 = vsyncadd [#allocation3], 0
      %s17 = sshll.u32 %s1, 4
      %s18 = int_to_ptr.hbm [resolvable:$true] %s17
      %s19 = sshll.u32 [#allocation2], 4
      %s20 = int_to_ptr.vmem [resolvable:$true] %s19
      %25 = dma.hbm_to_vmem [thread:$0]  %s18, 1024, %s20, [#allocation3], 64, 64, 4
    $region9: #{mlp_control_forward.1} parent=1 // pred_fallthru
      _
    // Predicated region
    $region10: #{mlp_control_forward.1} parent=1 // pred_check
      _
    $region11: #{mlp_control_forward.1} parent=1 // pred_check_branch
      %27 = sbr.rel (0) target = $region13
    $region12: #{mlp_control_forward.1} parent=1 // pred_region
      %29 = vsyncadd [#allocation5], 0
      %s30 = sshll.u32 %s2, 4
      %s31 = int_to_ptr.hbm [resolvable:$true] %s30
      %s32 = sshll.u32 [#allocation4], 4
      %s33 = int_to_ptr.vmem [resolvable:$true] %s32
      %38 = dma.hbm_to_vmem [thread:$0]  %s31, 3072, %s33, [#allocation5], 64, 64, 4
    $region13: #{mlp_control_forward.1} parent=1 // pred_fallthru
      _
    // Predicated region
    $region14: #{mlp_control_forward.1} parent=1 // pred_check
      _
    $region15: #{mlp_control_forward.1} parent=1 // pred_check_branch
      %40 = sbr.rel (0) target = $region17
    $region16: #{mlp_control_forward.1} parent=1 // pred_region
      _
    $region17: #{mlp_control_forward.1} parent=1 // pred_fallthru
      _
    // Predicated region
    $region18: #{mlp_control_forward.1} parent=1 // pred_check
      _
    $region19: #{mlp_control_forward.1} parent=1 // pred_check_branch
      %42 = sbr.rel (0) target = $region21
    $region20: #{mlp_control_forward.1} parent=1 // pred_region
      %44 = dma.done [#allocation3], 1024
    $region21: #{mlp_control_forward.1} parent=1 // pred_fallthru
      _
    // Predicated region
    $region22: #{mlp_control_forward.1} parent=1 // pred_check
      _
    $region23: #{mlp_control_forward.1} parent=1 // pred_check_branch
      %46 = sbr.rel (0) target = $region25
    $region24: #{mlp_control_forward.1} parent=1 // pred_region
      %48 = dma.done [#allocation5], 3072
    $region25: #{mlp_control_forward.1} parent=1 // pred_fallthru
      _
    %v49 = vld [vmem:[%s0] sm:$0xff]
    %v50 = vlaneseq
    %v51 = vand.u32 %v50, 127
    %52 = vset.pattern.permute.xlu0 0
    %53 = vperm.xlu0 %52, %v49
    %v54 = vpop.permute.xlu0 %53
    %vm55 = vcmp.eq.s32.totalorder %v54, %v51
    %v56 = vsel %vm55, 1, 0
    %v57 = vcvt.s32.f32 %v56
    %v58 = vadd.f32 %v57, 0.0
    %59 = vset.pattern.permute.xlu0 1
    %60 = vperm.xlu0 %59, %v49
    %v61 = vpop.permute.xlu0 %60
    %vm62 = vcmp.eq.s32.totalorder %v61, %v51
    %v63 = vsel %vm62, 1, 0
    %v64 = vcvt.s32.f32 %v63
    %v65 = vadd.f32 %v58, %v64
    %66 = vset.pattern.permute.xlu0 2
    %67 = vperm.xlu0 %66, %v49
    %v68 = vpop.permute.xlu0 %67
    %vm69 = vcmp.eq.s32.totalorder %v68, %v51
    %v70 = vsel %vm69, 1, 0
    %v71 = vcvt.s32.f32 %v70
    %v72 = vadd.f32 %v65, %v71
    %73 = vset.pattern.permute.xlu0 3
    %74 = vperm.xlu0 %73, %v49
    %v75 = vpop.permute.xlu0 %74
    %vm76 = vcmp.eq.s32.totalorder %v75, %v51
    %v77 = vsel %vm76, 1, 0
    %v78 = vcvt.s32.f32 %v77
    %v79 = vadd.f32 %v72, %v78
    %80 = vset.pattern.permute.xlu0 4
    %81 = vperm.xlu0 %80, %v49
    %v82 = vpop.permute.xlu0 %81
    %vm83 = vcmp.eq.s32.totalorder %v82, %v51
    %v84 = vsel %vm83, 1, 0
    %v85 = vcvt.s32.f32 %v84
    %v86 = vadd.f32 %v79, %v85
    %87 = vset.pattern.permute.xlu0 5
    %88 = vperm.xlu0 %87, %v49
    %v89 = vpop.permute.xlu0 %88
    %vm90 = vcmp.eq.s32.totalorder %v89, %v51
    %v91 = vsel %vm90, 1, 0
    %v92 = vcvt.s32.f32 %v91
    %v93 = vadd.f32 %v86, %v92
    %94 = vset.pattern.permute.xlu0 6
    %95 = vperm.xlu0 %94, %v49
    %v96 = vpop.permute.xlu0 %95
    %vm97 = vcmp.eq.s32.totalorder %v96, %v51
    %v98 = vsel %vm97, 1, 0
    %v99 = vcvt.s32.f32 %v98
    %v100 = vadd.f32 %v93, %v99
    %101 = vset.pattern.permute.xlu0 7
    %102 = vperm.xlu0 %101, %v49
    %v103 = vpop.permute.xlu0 %102
    %vm104 = vcmp.eq.s32.totalorder %v103, %v51
    %v105 = vsel %vm104, 1, 0
    %v106 = vcvt.s32.f32 %v105
    %v107 = vadd.f32 %v100, %v106
    %v108 = vpack.c.bf16 %v107, %v107
    %v109 = vld [vmem:[#allocation2] sm:$0xf]
    %v110 = vld [vmem:[#allocation2 + $0x4] sm:$0xf]
    %v111 = vld [vmem:[#allocation2 + $0x8] sm:$0xf]
    %v112 = vld [vmem:[#allocation2 + $0xc] sm:$0xf]
    %v113 = vld [vmem:[#allocation2 + $0x10] sm:$0xf]
    %v114 = vld [vmem:[#allocation2 + $0x14] sm:$0xf]
    %v115 = vld [vmem:[#allocation2 + $0x18] sm:$0xf]
    %v116 = vld [vmem:[#allocation2 + $0x1c] sm:$0xf]
    %v117 = vld [vmem:[#allocation2 + $0x20] sm:$0xf]
    %v118 = vld [vmem:[#allocation2 + $0x24] sm:$0xf]
    %v119 = vld [vmem:[#allocation2 + $0x28] sm:$0xf]
    %v120 = vld [vmem:[#allocation2 + $0x2c] sm:$0xf]
    %v121 = vld [vmem:[#allocation2 + $0x30] sm:$0xf]
    %v122 = vld [vmem:[#allocation2 + $0x34] sm:$0xf]
    %v123 = vld [vmem:[#allocation2 + $0x38] sm:$0xf]
    %v124 = vld [vmem:[#allocation2 + $0x3c] sm:$0xf]
    %v141 = vunpack.c.l.b16 %v109
    %v142 = vunpack.c.l.b16 %v110
    %v143 = vunpack.c.l.b16 %v111
    %v144 = vunpack.c.l.b16 %v112
    %v145 = vunpack.c.l.b16 %v113
    %v146 = vunpack.c.l.b16 %v114
    %v147 = vunpack.c.l.b16 %v115
    %v148 = vunpack.c.l.b16 %v116
    %v149 = vunpack.c.l.b16 %v117
    %v150 = vunpack.c.l.b16 %v118
    %v151 = vunpack.c.l.b16 %v119
    %v152 = vunpack.c.l.b16 %v120
    %v153 = vunpack.c.l.b16 %v121
    %v154 = vunpack.c.l.b16 %v122
    %v155 = vunpack.c.l.b16 %v123
    %v156 = vunpack.c.l.b16 %v124
    %v157 = vpack.c.b16 %v142, %v141
    %v158 = vpack.c.b16 %v144, %v143
    %v159 = vpack.c.b16 %v146, %v145
    %v160 = vpack.c.b16 %v148, %v147
    %v161 = vpack.c.b16 %v150, %v149
    %v162 = vpack.c.b16 %v152, %v151
    %v163 = vpack.c.b16 %v154, %v153
    %v164 = vpack.c.b16 %v156, %v155
    %173 = vmatpush.bf16.msra.mxu0 %v164
    %174 = vmatpush.bf16.msra.mxu0 %v163
    %175 = vmatpush.bf16.msra.mxu0 %v162
    %176 = vmatpush.bf16.msra.mxu0 %v161
    %177 = vmatpush.bf16.msra.mxu0 %v160
    %178 = vmatpush.bf16.msra.mxu0 %v159
    %179 = vmatpush.bf16.msra.mxu0 %v158
    %180 = vmatpush.bf16.msra.mxu0 %v157
    %181 = vmatmul.bf16.gmra.mxu0 %v108
    %v182 = vpop.f32.mrf.mxu0
    %v183 = vadd.f32 0.0, %v182
    %v184 = vpop.f32.mrf.mxu0
    %185 = vdwg.mxu0
    %v186 = vpack.c.bf16 %v183, %v183
    %v187 = vld [vmem:[#allocation4] sm:$0xf]
    %v188 = vld [vmem:[#allocation4 + $0x4] sm:$0xf]
    %v189 = vld [vmem:[#allocation4 + $0x8] sm:$0xf]
    %v190 = vld [vmem:[#allocation4 + $0xc] sm:$0xf]
    %v191 = vld [vmem:[#allocation4 + $0x10] sm:$0xf]
    %v192 = vld [vmem:[#allocation4 + $0x14] sm:$0xf]
    %v193 = vld [vmem:[#allocation4 + $0x18] sm:$0xf]
    %v194 = vld [vmem:[#allocation4 + $0x1c] sm:$0xf]
    %v195 = vld [vmem:[#allocation4 + $0x20] sm:$0xf]
    %v196 = vld [vmem:[#allocation4 + $0x24] sm:$0xf]
    %v197 = vld [vmem:[#allocation4 + $0x28] sm:$0xf]
    %v198 = vld [vmem:[#allocation4 + $0x2c] sm:$0xf]
    %v199 = vld [vmem:[#allocation4 + $0x30] sm:$0xf]
    %v200 = vld [vmem:[#allocation4 + $0x34] sm:$0xf]
    %v201 = vld [vmem:[#allocation4 + $0x38] sm:$0xf]
    %v202 = vld [vmem:[#allocation4 + $0x3c] sm:$0xf]
    %v203 = vld [vmem:[%s3] sm:$0x1]
    %v204 = vperm.slane %v203, 0
    %v221 = vunpack.c.l.b16 %v187
    %v222 = vunpack.c.l.b16 %v188
    %v223 = vunpack.c.l.b16 %v189
    %v224 = vunpack.c.l.b16 %v190
    %v225 = vunpack.c.l.b16 %v191
    %v226 = vunpack.c.l.b16 %v192
    %v227 = vunpack.c.l.b16 %v193
    %v228 = vunpack.c.l.b16 %v194
    %v229 = vunpack.c.l.b16 %v195
    %v230 = vunpack.c.l.b16 %v196
    %v231 = vunpack.c.l.b16 %v197
    %v232 = vunpack.c.l.b16 %v198
    %v233 = vunpack.c.l.b16 %v199
    %v234 = vunpack.c.l.b16 %v200
    %v235 = vunpack.c.l.b16 %v201
    %v236 = vunpack.c.l.b16 %v202
    %v237 = vpack.c.b16 %v222, %v221
    %v238 = vpack.c.b16 %v224, %v223
    %v239 = vpack.c.b16 %v226, %v225
    %v240 = vpack.c.b16 %v228, %v227
    %v241 = vpack.c.b16 %v230, %v229
    %v242 = vpack.c.b16 %v232, %v231
    %v243 = vpack.c.b16 %v234, %v233
    %v244 = vpack.c.b16 %v236, %v235
    %253 = vmatpush.bf16.msra.mxu0 %v244
    %254 = vmatpush.bf16.msra.mxu0 %v243
    %255 = vmatpush.bf16.msra.mxu0 %v242
    %256 = vmatpush.bf16.msra.mxu0 %v241
    %257 = vmatpush.bf16.msra.mxu0 %v240
    %258 = vmatpush.bf16.msra.mxu0 %v239
    %259 = vmatpush.bf16.msra.mxu0 %v238
    %260 = vmatpush.bf16.msra.mxu0 %v237
    %261 = vmatmul.bf16.gmra.mxu0 %v186
    %v262 = vpop.f32.mrf.mxu0
    %v263 = vadd.f32 %v204, %v262
    %v264 = vpop.f32.mrf.mxu0
    %265 = vdwg.mxu0
    %v266 = vmax.f32 %v263, 0.0
    %v267 = vpack.c.bf16 %v266, %v266
    %s268 = scalar_lea.vmem [#allocation4], 64
    %v269 = vld [vmem:[%s268] sm:$0xf]
    %v270 = vld [vmem:[%s268 + $0x4] sm:$0xf]
    %v271 = vld [vmem:[%s268 + $0x8] sm:$0xf]
    %v272 = vld [vmem:[%s268 + $0xc] sm:$0xf]
    %v273 = vld [vmem:[%s268 + $0x10] sm:$0xf]
    %v274 = vld [vmem:[%s268 + $0x14] sm:$0xf]
    %v275 = vld [vmem:[%s268 + $0x18] sm:$0xf]
    %v276 = vld [vmem:[%s268 + $0x1c] sm:$0xf]
    %v277 = vld [vmem:[%s268 + $0x20] sm:$0xf]
    %v278 = vld [vmem:[%s268 + $0x24] sm:$0xf]
    %v279 = vld [vmem:[%s268 + $0x28] sm:$0xf]
    %v280 = vld [vmem:[%s268 + $0x2c] sm:$0xf]
    %v281 = vld [vmem:[%s268 + $0x30] sm:$0xf]
    %v282 = vld [vmem:[%s268 + $0x34] sm:$0xf]
    %v283 = vld [vmem:[%s268 + $0x38] sm:$0xf]
    %v284 = vld [vmem:[%s268 + $0x3c] sm:$0xf]
    %v285 = vld [vmem:[%s3 + $0x1] sm:$0x1]
    %v286 = vperm.slane %v285, 0
    %v303 = vunpack.c.l.b16 %v269
    %v304 = vunpack.c.l.b16 %v270
    %v305 = vunpack.c.l.b16 %v271
    %v306 = vunpack.c.l.b16 %v272
    %v307 = vunpack.c.l.b16 %v273
    %v308 = vunpack.c.l.b16 %v274
    %v309 = vunpack.c.l.b16 %v275
    %v310 = vunpack.c.l.b16 %v276
    %v311 = vunpack.c.l.b16 %v277
    %v312 = vunpack.c.l.b16 %v278
    %v313 = vunpack.c.l.b16 %v279
    %v314 = vunpack.c.l.b16 %v280
    %v315 = vunpack.c.l.b16 %v281
    %v316 = vunpack.c.l.b16 %v282
    %v317 = vunpack.c.l.b16 %v283
    %v318 = vunpack.c.l.b16 %v284
    %v319 = vpack.c.b16 %v304, %v303
    %v320 = vpack.c.b16 %v306, %v305
    %v321 = vpack.c.b16 %v308, %v307
    %v322 = vpack.c.b16 %v310, %v309
    %v323 = vpack.c.b16 %v312, %v311
    %v324 = vpack.c.b16 %v314, %v313
    %v325 = vpack.c.b16 %v316, %v315
    %v326 = vpack.c.b16 %v318, %v317
    %335 = vmatpush.bf16.msra.mxu0 %v326
    %336 = vmatpush.bf16.msra.mxu0 %v325
    %337 = vmatpush.bf16.msra.mxu0 %v324
    %338 = vmatpush.bf16.msra.mxu0 %v323
    %339 = vmatpush.bf16.msra.mxu0 %v322
    %340 = vmatpush.bf16.msra.mxu0 %v321
    %341 = vmatpush.bf16.msra.mxu0 %v320
    %342 = vmatpush.bf16.msra.mxu0 %v319
    %343 = vmatmul.bf16.gmra.mxu0 %v267
    %v344 = vpop.f32.mrf.mxu0
    %v345 = vadd.f32 %v286, %v344
    %v346 = vpop.f32.mrf.mxu0
    %347 = vdwg.mxu0
    %v348 = vmax.f32 %v345, 0.0
    %v349 = vpack.c.bf16 %v348, %v348
    %s350 = scalar_lea.vmem [#allocation4], 128
    %v351 = vld [vmem:[%s350] sm:$0xf]
    %v352 = vld [vmem:[%s350 + $0x4] sm:$0xf]
    %v353 = vld [vmem:[%s350 + $0x8] sm:$0xf]
    %v354 = vld [vmem:[%s350 + $0xc] sm:$0xf]
    %v355 = vld [vmem:[%s350 + $0x10] sm:$0xf]
    %v356 = vld [vmem:[%s350 + $0x14] sm:$0xf]
    %v357 = vld [vmem:[%s350 + $0x18] sm:$0xf]
    %v358 = vld [vmem:[%s350 + $0x1c] sm:$0xf]
    %v359 = vld [vmem:[%s350 + $0x20] sm:$0xf]
    %v360 = vld [vmem:[%s350 + $0x24] sm:$0xf]
    %v361 = vld [vmem:[%s350 + $0x28] sm:$0xf]
    %v362 = vld [vmem:[%s350 + $0x2c] sm:$0xf]
    %v363 = vld [vmem:[%s350 + $0x30] sm:$0xf]
    %v364 = vld [vmem:[%s350 + $0x34] sm:$0xf]
    %v365 = vld [vmem:[%s350 + $0x38] sm:$0xf]
    %v366 = vld [vmem:[%s350 + $0x3c] sm:$0xf]
    %v367 = vld [vmem:[%s3 + $0x2] sm:$0x1]
    %v368 = vperm.slane %v367, 0
    %v385 = vunpack.c.l.b16 %v351
    %v386 = vunpack.c.l.b16 %v352
    %v387 = vunpack.c.l.b16 %v353
    %v388 = vunpack.c.l.b16 %v354
    %v389 = vunpack.c.l.b16 %v355
    %v390 = vunpack.c.l.b16 %v356
    %v391 = vunpack.c.l.b16 %v357
    %v392 = vunpack.c.l.b16 %v358
    %v393 = vunpack.c.l.b16 %v359
    %v394 = vunpack.c.l.b16 %v360
    %v395 = vunpack.c.l.b16 %v361
    %v396 = vunpack.c.l.b16 %v362
    %v397 = vunpack.c.l.b16 %v363
    %v398 = vunpack.c.l.b16 %v364
    %v399 = vunpack.c.l.b16 %v365
    %v400 = vunpack.c.l.b16 %v366
    %v401 = vpack.c.b16 %v386, %v385
    %v402 = vpack.c.b16 %v388, %v387
    %v403 = vpack.c.b16 %v390, %v389
    %v404 = vpack.c.b16 %v392, %v391
    %v405 = vpack.c.b16 %v394, %v393
    %v406 = vpack.c.b16 %v396, %v395
    %v407 = vpack.c.b16 %v398, %v397
    %v408 = vpack.c.b16 %v400, %v399
    %417 = vmatpush.bf16.msra.mxu0 %v408
    %418 = vmatpush.bf16.msra.mxu0 %v407
    %419 = vmatpush.bf16.msra.mxu0 %v406
    %420 = vmatpush.bf16.msra.mxu0 %v405
    %421 = vmatpush.bf16.msra.mxu0 %v404
    %422 = vmatpush.bf16.msra.mxu0 %v403
    %423 = vmatpush.bf16.msra.mxu0 %v402
    %424 = vmatpush.bf16.msra.mxu0 %v401
    %425 = vmatmul.bf16.gmra.mxu0 %v349
    %v426 = vpop.f32.mrf.mxu0
    %v427 = vadd.f32 %v368, %v426
    %v428 = vpop.f32.mrf.mxu0
    %429 = vdwg.mxu0
    %430 = vst [vmem:[%s4] sm:$0xff] %v427
    // Predicated region
    $region26: #{mlp_control_forward.1} parent=1 // pred_check
      _
    $region27: #{mlp_control_forward.1} parent=1 // pred_check_branch
      %432 = sbr.rel (0) target = $region29
    $region28: #{mlp_control_forward.1} parent=1 // pred_region
      _
    $region29: #{mlp_control_forward.1} parent=1 // pred_fallthru
      _
    // Predicated region
    $region30: #{mlp_control_forward.1} parent=1 // pred_check
      _
    $region31: #{mlp_control_forward.1} parent=1 // pred_check_branch
      %434 = sbr.rel (0) target = $region33
    $region32: #{mlp_control_forward.1} parent=1 // pred_region
      _
    $region33: #{mlp_control_forward.1} parent=1 // pred_fallthru
      _
    %435 = vsyncpa [#allocation3], 1
    %436 = vsyncpa [#allocation5], 1

</llo_original>
